<compile_context>
chip_gen: v7x
topology: tpu7x:2x2x1
jax: 0.10.0
libtpu: 0.0.40
codegen_flags: <defaults>
</compile_context>

<pallas_src>
import jax
import jax.numpy as jnp
from jax.experimental import pallas as pl
from jax.experimental.pallas import tpu as pltpu


def _overlap_kernel(f_ref, l_ref, o_ref):
    # Elementwise blend on the VPU in the native dtype: f*0.5 + l*0.5.
    # (Matches the reference op exactly for f32; avoids (f+l) overflow.)
    half = jnp.asarray(0.5, dtype=o_ref.dtype)
    o_ref[...] = f_ref[...] * half + l_ref[...] * half


def _choose_lane(total: int, sub: int):
    """Pick a lane width (multiple of 128) for a lane-dense 2D slab.

    Preference order:
      1. largest lane where rows is a multiple of the sublane count,
      2. largest lane where rows >= sublane count,
      3. largest lane that divides `total`,
      4. None -> caller must pad.
    """
    cands = (1024, 512, 256, 128)
    for pred in (
        lambda r: r % sub == 0 and r >= sub,
        lambda r: r >= sub,
        lambda r: True,
    ):
        for cand in cands:
            if total % cand == 0 and pred(total // cand):
                return cand
    return None


def overlap(frame_f: jax.Array, frame_l: jax.Array) -> jax.Array:
    assert frame_f.shape == frame_l.shape
    assert frame_f.dtype == frame_l.dtype
    orig_shape = frame_f.shape
    total = frame_f.size
    dtype = frame_f.dtype
    itemsize = jnp.dtype(dtype).itemsize
    # Sublane multiple for this dtype: 8 (f32), 16 (bf16), 32 (int8/fp8).
    sub = max(8, 32 // itemsize)

    # ---- lane-dense 2D layout: last dim a multiple of 128 ----
    lane = _choose_lane(total, sub)
    if lane is None:
        # Non-128-divisible total: pad the flat array to a whole-vreg
        # multiple so stores are unmasked `vst`, then slice the result back.
        pad_unit = sub * 128
        padded_total = -(-total // pad_unit) * pad_unit
        pad = padded_total - total
        f_flat = jnp.pad(frame_f.reshape(-1), (0, pad))
        l_flat = jnp.pad(frame_l.reshape(-1), (0, pad))
        lane = 128
    else:
        padded_total = total
        f_flat = frame_f.reshape(-1)
        l_flat = frame_l.reshape(-1)

    rows = padded_total // lane
    f2 = f_flat.reshape(rows, lane)
    l2 = l_flat.reshape(rows, lane)

    # ---- row tiling: ~4 MiB streaming blocks per array ----
    target_block_bytes = 4 << 20
    tr_budget = max(sub, (target_block_bytes // (lane * itemsize)) // sub * sub)

    total_bytes = rows * lane * itemsize
    if total_bytes > (1 << 20) and rows >= 2 * sub:
        # Guarantee >= 2 grid steps (>= 8 for very large slabs) so the
        # in/out DMA pipeline overlaps and the "parallel" axis has work to
        # shard across v7x's two TensorCores.
        min_steps = 8 if total_bytes >= (32 << 20) else 2
        step_cap = max(sub, (rows // min_steps) // sub * sub)
        tr = min(tr_budget, step_cap)
    else:
        tr = min(rows, tr_budget)
    tr = max(1, min(tr, rows))
    grid = (pl.cdiv(rows, tr),)

    out2 = pl.pallas_call(
        _overlap_kernel,
        out_shape=jax.ShapeDtypeStruct((rows, lane), dtype),
        grid=grid,
        in_specs=[
            pl.BlockSpec((tr, lane), lambda i: (i, 0)),
            pl.BlockSpec((tr, lane), lambda i: (i, 0)),
        ],
        out_specs=pl.BlockSpec((tr, lane), lambda i: (i, 0)),
        compiler_params=pltpu.CompilerParams(
            dimension_semantics=("parallel",),
            # 3 arrays x 2 buffers x 4 MiB blocks = 24 MiB; set explicitly so
            # v5e's 16 MiB scoped default doesn't reject it, while staying
            # well under v7x's 64 MiB physical VMEM.
            vmem_limit_bytes=48 << 20,
        ),
        cost_estimate=pl.CostEstimate(
            flops=2 * total,
            transcendentals=0,
            bytes_accessed=3 * total * itemsize,
        ),
    )(f2, l2)

    out_flat = out2.reshape(-1)
    if padded_total != total:
        out_flat = out_flat[:total]
    return out_flat.reshape(orig_shape)


if __name__ == "__main__":
    key = jax.random.PRNGKey(0)
    k1, k2 = jax.random.split(key)
    # NCHW frames, small shapes (the module has no parameters).
    frame_f = jax.random.normal(k1, (2, 4, 16, 16), dtype=jnp.float32)
    frame_l = jax.random.normal(k2, (2, 4, 16, 16), dtype=jnp.float32)

    out = overlap(frame_f, frame_l)
    jax.block_until_ready(out)

    # Correctness check against the plain JAX reference.
    ref = frame_f * 0.5 + frame_l * 0.5
    assert out.shape == frame_f.shape
    assert jnp.allclose(out, ref, atol=1e-6), "mismatch vs reference"

    print("KERNEL_OK")
</pallas_src>

<mosaic_0001>
module attributes {stable_mosaic.version = 11 : i64} {
  func.func @_overlap_kernel(%arg0: i32, %arg1: memref<8x256xf32, #tpu.memory_space<vmem>>, %arg2: memref<8x256xf32, #tpu.memory_space<vmem>>, %arg3: memref<8x256xf32, #tpu.memory_space<vmem>>) attributes {dimension_semantics = [#tpu.dimension_semantics<parallel>], iteration_bounds = array<i64: 1>, scalar_prefetch = 0 : i64, scratch_operands = 0 : i64, tpu.core_type = #tpu.core_type<tc>, window_params = [{transform_indices = @transform_0, window_bounds = array<i64: 8, 256>}, {transform_indices = @transform_1, window_bounds = array<i64: 8, 256>}, {transform_indices = @transform_2, window_bounds = array<i64: 8, 256>}]} {
    %c0 = arith.constant 0 : index
    %c0_0 = arith.constant 0 : index
    %0 = vector.load %arg1[%c0, %c0_0] : memref<8x256xf32, #tpu.memory_space<vmem>>, vector<8x256xf32>
    %cst = arith.constant 5.000000e-01 : f32
    %1 = vector.broadcast %cst : f32 to vector<8x256xf32>
    %2 = arith.mulf %0, %1 : vector<8x256xf32>
    %c0_1 = arith.constant 0 : index
    %c0_2 = arith.constant 0 : index
    %3 = vector.load %arg2[%c0_1, %c0_2] : memref<8x256xf32, #tpu.memory_space<vmem>>, vector<8x256xf32>
    %cst_3 = arith.constant 5.000000e-01 : f32
    %4 = vector.broadcast %cst_3 : f32 to vector<8x256xf32>
    %5 = arith.mulf %3, %4 : vector<8x256xf32>
    %6 = arith.addf %2, %5 : vector<8x256xf32>
    %c0_4 = arith.constant 0 : index
    %c0_5 = arith.constant 0 : index
    %7 = vector.load %arg3[%c0_4, %c0_5] : memref<8x256xf32, #tpu.memory_space<vmem>>, vector<8x256xf32>
    tpu.vector_store %arg3[%c0_4, %c0_5], %6 {strides = array<i32>} : memref<8x256xf32, #tpu.memory_space<vmem>>, vector<8x256xf32>,
    return
  }
  func.func @transform_0(%arg0: i32) -> (i32, i32) {
    %c0_i32 = arith.constant 0 : i32
    %c0_i32_0 = arith.constant 0 : i32
    return %arg0, %c0_i32 : i32, i32
  }
  func.func @transform_1(%arg0: i32) -> (i32, i32) {
    %c0_i32 = arith.constant 0 : i32
    %c0_i32_0 = arith.constant 0 : i32
    return %arg0, %c0_i32 : i32, i32
  }
  func.func @transform_2(%arg0: i32) -> (i32, i32) {
    %c0_i32 = arith.constant 0 : i32
    %c0_i32_0 = arith.constant 0 : i32
    return %arg0, %c0_i32 : i32, i32
  }
}

</mosaic_0001>

<llo_original>
// kernel: tpu_custom_call.1
$region0: #{tpu_custom_call.1}
  #allocation0 [shape = 'u32[]', space=smem, size = 0x4, offset = 0x4, fixed_abs, tag = 'smem constant byte address 0x4 - core index']
  #allocation1 [shape = 'u32[144,128]{1,0:T(1,128)}', space=vmem, size = 0x12000, scoped, tag = 'internal scratch']
  %s0 = inlined_call_operand.hbm [shape: f32[8,256], index: 0, kind: input, shape index: {}]
  %s1 = inlined_call_operand.hbm [shape: f32[8,256], index: 1, kind: input, shape index: {}]
  %s2 = inlined_call_operand.hbm [shape: f32[8,256], index: 2, kind: output, shape index: {}]
  %s3 = sld [smem:[#allocation0]]
  $region26: #{tpu_custom_call.1} parent=0
    _
  %s5 = ssub.s32 1, %s3
  %s6 = scalar_select 0, %s5, %s3
  $region1: #{tpu_custom_call.1} parent=0
    #allocation2 [shape = 'u8[8192]{0}', space=vmem, size = 0x2000, scoped, tag = 'input window, operand 0, single buffered']
    #allocation3 [shape = 's32[1]{0}', space=sflag, size = 0x4, scoped, tag = 'scoped memory for tpu_custom_call.1']
    #allocation4 [shape = 's32[1]{0}', space=sflag, size = 0x4, scoped, tag = 'scoped memory for tpu_custom_call.1']
    #allocation5 [shape = 'u8[8192]{0}', space=vmem, size = 0x2000, scoped, tag = 'input window, operand 1, single buffered']
    #allocation6 [shape = 's32[1]{0}', space=sflag, size = 0x4, scoped, tag = 'scoped memory for tpu_custom_call.1']
    #allocation7 [shape = 'u8[8192]{0}', space=vmem, size = 0x2000, scoped, tag = 'output window, operand 0, single buffered']
    %7 = vsyncpa [#allocation3], 0
    %8 = vsyncpa [#allocation6], 0
    %9 = vsyncpa [#allocation4], 0
    // Predicated region
    $region2: #{tpu_custom_call.1} parent=1 // pred_check
      _
    $region3: #{tpu_custom_call.1} parent=1 // pred_check_branch
      %11 = sbr.rel (0) target = $region5
    $region4: #{tpu_custom_call.1} parent=1 // pred_region
      %s13 = ssub.s32 256, 256
      %14 = vsyncadd [#allocation3], %s13
      %s16 = sshll.u32 [#allocation2], 4
      %s17 = int_to_ptr.vmem [resolvable:$true] %s16
      %19 = dma.hbm_to_vmem [thread:$0]  %s0, 256, %s17, [#allocation3]
    $region5: #{tpu_custom_call.1} parent=1 // pred_fallthru
      _
    // Predicated region
    $region6: #{tpu_custom_call.1} parent=1 // pred_check
      _
    $region7: #{tpu_custom_call.1} parent=1 // pred_check_branch
      %21 = sbr.rel (0) target = $region9
    $region8: #{tpu_custom_call.1} parent=1 // pred_region
      %s23 = ssub.s32 256, 256
      %24 = vsyncadd [#allocation6], %s23
      %s26 = sshll.u32 [#allocation5], 4
      %s27 = int_to_ptr.vmem [resolvable:$true] %s26
      %29 = dma.hbm_to_vmem [thread:$0]  %s1, 256, %s27, [#allocation6]
    $region9: #{tpu_custom_call.1} parent=1 // pred_fallthru
      _
    // Predicated region
    $region10: #{tpu_custom_call.1} parent=1 // pred_check
      _
    $region11: #{tpu_custom_call.1} parent=1 // pred_check_branch
      %31 = sbr.rel (0) target = $region13
    $region12: #{tpu_custom_call.1} parent=1 // pred_region
      %32 = dma.done [#allocation3], 256
    $region13: #{tpu_custom_call.1} parent=1 // pred_fallthru
      _
    // Predicated region
    $region14: #{tpu_custom_call.1} parent=1 // pred_check
      _
    $region15: #{tpu_custom_call.1} parent=1 // pred_check_branch
      %34 = sbr.rel (0) target = $region17
    $region16: #{tpu_custom_call.1} parent=1 // pred_region
      %35 = dma.done [#allocation6], 256
    $region17: #{tpu_custom_call.1} parent=1 // pred_fallthru
      _
    %v36 = vld [vmem:[#allocation2] sm:$0xff]
    %v37 = vld [vmem:[#allocation2 + $0x8] sm:$0xff]
    %v38 = vmul.f32 %v36, 0.5
    %v39 = vmul.f32 %v37, 0.5
    %v40 = vld [vmem:[#allocation5] sm:$0xff]
    %v41 = vld [vmem:[#allocation5 + $0x8] sm:$0xff]
    %v42 = vmul.f32 %v40, 0.5
    %v43 = vmul.f32 %v41, 0.5
    %v44 = vadd.f32 %v38, %v42
    %v45 = vadd.f32 %v39, %v43
    %46 = vst [vmem:[#allocation7] sm:$0xff] %v44
    %47 = vst [vmem:[#allocation7 + $0x8] sm:$0xff] %v45
    // Predicated region
    $region18: #{tpu_custom_call.1} parent=1 // pred_check
      _
    $region19: #{tpu_custom_call.1} parent=1 // pred_check_branch
      %49 = sbr.rel (0) target = $region21
    $region20: #{tpu_custom_call.1} parent=1 // pred_region
      %s51 = ssub.s32 256, 256
      %52 = vsyncadd [#allocation4], %s51
      %s54 = sshll.u32 [#allocation7], 4
      %s55 = int_to_ptr.vmem [resolvable:$true] %s54
      %57 = dma.vmem_to_hbm [thread:$0]  %s55, 256, %s2, [#allocation4]
    $region21: #{tpu_custom_call.1} parent=1 // pred_fallthru
      _
    // Predicated region
    $region22: #{tpu_custom_call.1} parent=1 // pred_check
      _
    $region23: #{tpu_custom_call.1} parent=1 // pred_check_branch
      %59 = sbr.rel (0) target = $region25
    $region24: #{tpu_custom_call.1} parent=1 // pred_region
      %60 = dma.done [#allocation4], 256
    $region25: #{tpu_custom_call.1} parent=1 // pred_fallthru
      _
    %61 = vsyncpa [#allocation3], 1
    %62 = vsyncpa [#allocation6], 1
    %63 = vsyncpa [#allocation4], 1

</llo_original>
